<compile_context>
chip_gen: v5e
topology: v5e:2x2
jax: 0.10.0
libtpu: 0.0.40
codegen_flags: <defaults>
</compile_context>

<pallas_src>
import functools

import jax
import jax.numpy as jnp
from jax.experimental import pallas as pl
from jax.experimental.pallas import tpu as pltpu

# ----------------------------- configuration --------------------------------
B = 16                # test batch size -> 2 query tiles ("parallel" axis, v7x megacore)
D = 32                # feature dim (real DINOv2 is 768/1024; small for the demo)
N = 1000              # train samples on this rank (not a tile multiple -> exercises masking)
NUM_CLASSES = 16
NB_KNN = (2, 4)       # list of k values
MAX_K = max(NB_KNN)
T = 0.07              # softmax temperature

TILE_B = 8            # query-row tile (parallel axis)
TILE_N = 512          # train-sample tile (streamed "arbitrary" reduction axis)
C_PAD = max(128, ((NUM_CLASSES + 127) // 128) * 128)   # lane-dense class axis
LABEL_BITS = max(1, (NUM_CLASSES - 1).bit_length())    # 4 bits for 16 classes
LMASK = (1 << LABEL_BITS) - 1


def _round_up(x, m):
    return ((x + m - 1) // m) * m


# --------------------------- fused k-NN kernel -------------------------------
def knn_fused_kernel(f_ref, t_ref, lab_ref, o_ref, topk_ref, *, nb_knn, temperature):
    ni = pl.program_id(1)
    n_tiles = pl.num_programs(1)
    tile_b = f_ref.shape[0]
    max_k = max(nb_knn)

    # ---- init running top-k packed keys at the first N tile of each B tile ---
    @pl.when(ni == 0)
    def _init():
        topk_ref[...] = jnp.full_like(topk_ref, -jnp.inf)

    # ---- similarity tile on the MXU (bf16 inputs, f32 accumulation) ----------
    sims = jnp.dot(f_ref[...], t_ref[...], preferred_element_type=jnp.float32)

    # ---- pack (similarity, label) into ONE sortable f32 key ------------------
    # The low LABEL_BITS mantissa bits of the f32 similarity are cleared and
    # replaced by the neighbor label (pre-cast to int32 in the wrapper; padded
    # columns carry -1 and double as the validity mask -> no per-tile iota).
    # Quantization error <= 2^LABEL_BITS ulps (~2e-6 relative): well inside the
    # evaluation tolerance.  Ties in the quantized key collapse to one pick
    # (measure-zero for continuous random similarities).
    lab = lab_ref[...]                                        # (1, tile_n) int32, -1 = padded
    bits = pltpu.bitcast(sims, jnp.int32)
    keys = pltpu.bitcast((bits & ~LMASK) | lab, jnp.float32)
    keys = jnp.where(lab >= 0, keys, -jnp.inf)                # padded columns never win

    # ---- tile-local top-MAX_K: one f32 row-max + one equality-clear per pick --
    lane = jax.lax.broadcasted_iota(jnp.int32, (tile_b, max_k), 1)
    local = jnp.full((tile_b, max_k), -jnp.inf, dtype=jnp.float32)
    work = keys
    for i in range(max_k):                                    # static unroll
        m = jnp.max(work, axis=1, keepdims=True)
        local = jnp.where(lane == i, m, local)
        if i + 1 < max_k:
            work = jnp.where(work == m, -jnp.inf, work)

    # ---- merge tile-local winners with the MAX_K running winners (width 2*K) --
    merged = jnp.concatenate([topk_ref[...], local], axis=1)  # (tile_b, 2*max_k)
    new_top = jnp.full((tile_b, max_k), -jnp.inf, dtype=jnp.float32)
    for i in range(max_k):
        m = jnp.max(merged, axis=1, keepdims=True)
        new_top = jnp.where(lane == i, m, new_top)
        if i + 1 < max_k:
            merged = jnp.where(merged == m, -jnp.inf, merged)
    topk_ref[...] = new_top

    # ---- epilogue at the last N tile: softmax + per-k weighted one-hot sums --
    @pl.when(ni == n_tiles - 1)
    def _epilogue():
        kbits = pltpu.bitcast(new_top, jnp.int32)
        labels = kbits & LMASK                                # int32 neighbor labels
        top_sims = pltpu.bitcast(kbits & ~LMASK, jnp.float32) # quantized top-k sims

        # NOTE: assumes n_real >= MAX_K (else all keys are -inf and softmax NaNs).
        logits = top_sims * (1.0 / temperature)
        mx = jnp.max(logits, axis=1, keepdims=True)
        e = jnp.exp(logits - mx)
        s = jnp.sum(e, axis=1, keepdims=True)
        w = e * pl.reciprocal(s, approx=True)                 # EUP slot, effectively free

        cpad = o_ref.shape[2]
        class_iota = jax.lax.broadcasted_iota(jnp.int32, (tile_b, cpad), 1)
        acc = jnp.zeros((tile_b, cpad), dtype=jnp.float32)
        j = 0
        for ki, k in sorted(enumerate(nb_knn), key=lambda t: t[1]):  # cumulative prefix sums
            while j < k:
                onehot_j = (labels[:, j:j + 1] == class_iota).astype(jnp.float32)
                acc = acc + w[:, j:j + 1] * onehot_j
                j += 1
            o_ref[ki, :, :] = acc


# ----------------------- one-time ("__init__") preparation --------------------
def prepare_train(train_features, train_labels):
    """Hoisted out of forward: pad + cast the rank-local train matrix to bf16
    once, and pre-pack the label row as int32 with -1 marking padded columns
    (the -1 doubles as the validity mask inside the kernel)."""
    n, _ = train_features.shape
    n_pad = _round_up(max(n, TILE_N), TILE_N)
    t_bf = jnp.pad(train_features.T, ((0, 0), (0, n_pad - n))).astype(jnp.bfloat16)
    lab = jnp.pad(train_labels.astype(jnp.int32), (0, n_pad - n),
                  constant_values=-1).reshape(1, n_pad)
    return t_bf, lab


# ------------------------------ forward wrapper --------------------------------
@jax.jit
def knn_forward(features_rank, train_T_bf16, label_row):
    """Returns {k: (B, NUM_CLASSES) class probabilities} like KnnModule.forward."""
    b, d = features_rank.shape
    _, n_pad = train_T_bf16.shape
    assert b % TILE_B == 0 and n_pad % TILE_N == 0

    b_tiles = b // TILE_B
    n_tiles = n_pad // TILE_N

    # bf16 query cast per call; train matrix / labels already prepared once.
    f_bf = features_rank.astype(jnp.bfloat16)

    kernel = functools.partial(knn_fused_kernel, nb_knn=NB_KNN, temperature=T)

    out_pad = pl.pallas_call(
        kernel,
        out_shape=jax.ShapeDtypeStruct((len(NB_KNN), b, C_PAD), jnp.float32),
        grid=(b_tiles, n_tiles),
        in_specs=[
            pl.BlockSpec((TILE_B, d), lambda bi, ni: (bi, 0)),    # queries: resident over N
            pl.BlockSpec((d, TILE_N), lambda bi, ni: (0, ni)),    # train tiles: streamed
            pl.BlockSpec((1, TILE_N), lambda bi, ni: (0, ni)),    # packed label row: streamed
        ],
        out_specs=pl.BlockSpec((len(NB_KNN), TILE_B, C_PAD),
                               lambda bi, ni: (0, bi, 0)),        # lane-dense, written at last N tile
        scratch_shapes=[
            pltpu.VMEM((TILE_B, MAX_K), jnp.float32),             # running top-k packed keys
        ],
        compiler_params=pltpu.CompilerParams(
            dimension_semantics=("parallel", "arbitrary"),
            vmem_limit_bytes=32 * 1024 * 1024,                    # v7x-safe scoped budget
        ),
        cost_estimate=pl.CostEstimate(
            flops=2 * b * n_pad * d,
            transcendentals=b * (MAX_K + 1),
            bytes_accessed=(b * d * 2 + d * n_pad * 2 + n_pad * 4
                            + len(NB_KNN) * b * C_PAD * 4),
        ),
    )(f_bf, train_T_bf16, label_row)

    return {k: out_pad[ki, :, :NUM_CLASSES] for ki, k in enumerate(NB_KNN)}


# ---------------------------- pure-JAX reference ------------------------------
def knn_forward_ref(features_rank, train_features_T, candidates):
    f = features_rank.astype(jnp.bfloat16)
    t = train_features_T.astype(jnp.bfloat16)
    sim = jnp.dot(f, t, preferred_element_type=jnp.float32)
    topk_sims, indices = jax.lax.top_k(sim, MAX_K)
    neighbors_labels = jnp.take(candidates, indices, axis=0)
    w = jax.nn.softmax(topk_sims / T, axis=1)
    onehot = jax.nn.one_hot(neighbors_labels, NUM_CLASSES, dtype=jnp.float32)
    contrib = onehot * w[:, :, None]
    return {k: jnp.sum(contrib[:, :k, :], axis=1) for k in NB_KNN}


if __name__ == "__main__":
    key = jax.random.PRNGKey(0)
    k1, k2, k3 = jax.random.split(key, 3)

    # Deterministic synthetic "checkpoint": train features / labels (module __init__ args)
    train_features = jax.random.normal(k1, (N, D), dtype=jnp.float32)
    train_labels = jax.random.randint(k2, (N,), 0, NUM_CLASSES, dtype=jnp.int32)

    # Forward input
    features_rank = jax.random.normal(k3, (B, D), dtype=jnp.float32)

    # "__init__"-time prep (done once, not per forward call).
    train_T_bf16, label_row = prepare_train(train_features, train_labels)
    train_T_bf16 = jax.block_until_ready(train_T_bf16)

    out = knn_forward(features_rank, train_T_bf16, label_row)
    out = {k: jax.block_until_ready(v) for k, v in out.items()}

    ref = knn_forward_ref(features_rank, train_features.T, train_labels)
    for k in NB_KNN:
        assert out[k].shape == (B, NUM_CLASSES)
        # 2e-3 tolerance: bf16 matmul + 4-low-mantissa-bit key quantization.
        assert jnp.allclose(out[k], ref[k], atol=2e-3, rtol=2e-3), f"mismatch for k={k}"

    print("KERNEL_OK")
</pallas_src>

<mosaic_0001>
module attributes {stable_mosaic.version = 11 : i64} {
  func.func @knn_fused_kernel(%arg0: i32, %arg1: i32, %arg2: memref<8x32xbf16, #tpu.memory_space<vmem>>, %arg3: memref<32x512xbf16, #tpu.memory_space<vmem>>, %arg4: memref<1x512xi32, #tpu.memory_space<vmem>>, %arg5: memref<2x8x128xf32, #tpu.memory_space<vmem>>, %arg6: memref<8x4xf32, #tpu.memory_space<vmem>>) attributes {dimension_semantics = [#tpu.dimension_semantics<parallel>, #tpu.dimension_semantics<arbitrary>], iteration_bounds = array<i64: 2, 2>, scalar_prefetch = 0 : i64, scratch_operands = 1 : i64, tpu.core_type = #tpu.core_type<tc>, window_params = [{transform_indices = @transform_0, window_bounds = array<i64: 8, 32>}, {transform_indices = @transform_1, window_bounds = array<i64: 32, 512>}, {transform_indices = @transform_2, window_bounds = array<i64: 1, 512>}, {transform_indices = @transform_3, window_bounds = array<i64: 2, 8, 128>}]} {
    %c0_i32 = arith.constant 0 : i32
    %0 = arith.cmpi eq, %arg1, %c0_i32 : i32
    %1 = arith.extui %0 : i1 to i32
    %c0_i32_0 = arith.constant 0 : i32
    %2 = arith.cmpi ne, %1, %c0_i32_0 : i32
    scf.if %2 {
      %cst_35 = arith.constant 0xFF800000 : f32
      %108 = vector.broadcast %cst_35 : f32 to vector<8x4xf32>
      %c0_36 = arith.constant 0 : index
      %c0_37 = arith.constant 0 : index
      %109 = vector.load %arg6[%c0_36, %c0_37] : memref<8x4xf32, #tpu.memory_space<vmem>>, vector<8x4xf32>
      tpu.vector_store %arg6[%c0_36, %c0_37], %108 {strides = array<i32>} : memref<8x4xf32, #tpu.memory_space<vmem>>, vector<8x4xf32>,
    } else {
    }
    %c0 = arith.constant 0 : index
    %c0_1 = arith.constant 0 : index
    %3 = vector.load %arg2[%c0, %c0_1] : memref<8x32xbf16, #tpu.memory_space<vmem>>, vector<8x32xbf16>
    %c0_2 = arith.constant 0 : index
    %c0_3 = arith.constant 0 : index
    %4 = vector.load %arg3[%c0_2, %c0_3] : memref<32x512xbf16, #tpu.memory_space<vmem>>, vector<32x512xbf16>
    %cst = arith.constant dense<0.000000e+00> : vector<8x512xf32>
    %5 = tpu.matmul %3, %4, %cst {dimension_numbers = #tpu.dot_dimension_numbers<[1], [0], [0], [1], [0, 0, 1, 1], [], []>} : vector<8x32xbf16>, vector<32x512xbf16>, vector<8x512xf32> -> vector<8x512xf32>
    %c0_4 = arith.constant 0 : index
    %c0_5 = arith.constant 0 : index
    %6 = vector.load %arg4[%c0_4, %c0_5] : memref<1x512xi32, #tpu.memory_space<vmem>>, vector<1x512xi32>
    %7 = tpu.bitcast %5 : vector<8x512xf32> -> vector<8x512xi32>
    %c-16_i32 = arith.constant -16 : i32
    %8 = vector.broadcast %c-16_i32 : i32 to vector<8x512xi32>
    %9 = arith.andi %7, %8 : vector<8x512xi32>
    %10 = vector.broadcast %6 : vector<1x512xi32> to vector<8x512xi32>
    %11 = arith.ori %9, %10 : vector<8x512xi32>
    %12 = tpu.bitcast %11 : vector<8x512xi32> -> vector<8x512xf32>
    %c0_i32_6 = arith.constant 0 : i32
    %13 = vector.broadcast %c0_i32_6 : i32 to vector<1x512xi32>
    %14 = arith.cmpi sge, %6, %13 : vector<1x512xi32>
    %cst_7 = arith.constant 0xFF800000 : f32
    %15 = vector.shape_cast %14 : vector<1x512xi1> to vector<1x512xi1>
    %16 = vector.broadcast %15 : vector<1x512xi1> to vector<8x512xi1>
    %17 = vector.broadcast %cst_7 : f32 to vector<8x512xf32>
    %18 = arith.select %16, %12, %17 : vector<8x512xi1>, vector<8x512xf32>
    %19 = tpu.iota {dimensions = array<i32: 1>} : vector<8x4xi32>
    %cst_8 = arith.constant 0xFF800000 : f32
    %20 = vector.broadcast %cst_8 : f32 to vector<8x4xf32>
    %cst_9 = arith.constant dense<0xFF800000> : vector<8xf32>
    %21 = vector.multi_reduction <maximumf>, %18, %cst_9 [1] : vector<8x512xf32> to vector<8xf32>
    %22 = vector.shape_cast %21 : vector<8xf32> to vector<8x1xf32>
    %c0_i32_10 = arith.constant 0 : i32
    %23 = vector.broadcast %c0_i32_10 : i32 to vector<8x4xi32>
    %24 = arith.cmpi eq, %19, %23 : vector<8x4xi32>
    %25 = vector.shape_cast %22 : vector<8x1xf32> to vector<8x1xf32>
    %26 = vector.broadcast %25 : vector<8x1xf32> to vector<8x4xf32>
    %27 = arith.select %24, %26, %20 : vector<8x4xi1>, vector<8x4xf32>
    %28 = vector.broadcast %22 : vector<8x1xf32> to vector<8x512xf32>
    %29 = arith.cmpf oeq, %18, %28 : vector<8x512xf32>
    %cst_11 = arith.constant 0xFF800000 : f32
    %30 = vector.broadcast %cst_11 : f32 to vector<8x512xf32>
    %31 = arith.select %29, %30, %18 : vector<8x512xi1>, vector<8x512xf32>
    %cst_12 = arith.constant dense<0xFF800000> : vector<8xf32>
    %32 = vector.multi_reduction <maximumf>, %31, %cst_12 [1] : vector<8x512xf32> to vector<8xf32>
    %33 = vector.shape_cast %32 : vector<8xf32> to vector<8x1xf32>
    %c1_i32 = arith.constant 1 : i32
    %34 = vector.broadcast %c1_i32 : i32 to vector<8x4xi32>
    %35 = arith.cmpi eq, %19, %34 : vector<8x4xi32>
    %36 = vector.shape_cast %33 : vector<8x1xf32> to vector<8x1xf32>
    %37 = vector.broadcast %36 : vector<8x1xf32> to vector<8x4xf32>
    %38 = arith.select %35, %37, %27 : vector<8x4xi1>, vector<8x4xf32>
    %39 = vector.broadcast %33 : vector<8x1xf32> to vector<8x512xf32>
    %40 = arith.cmpf oeq, %31, %39 : vector<8x512xf32>
    %cst_13 = arith.constant 0xFF800000 : f32
    %41 = vector.broadcast %cst_13 : f32 to vector<8x512xf32>
    %42 = arith.select %40, %41, %31 : vector<8x512xi1>, vector<8x512xf32>
    %cst_14 = arith.constant dense<0xFF800000> : vector<8xf32>
    %43 = vector.multi_reduction <maximumf>, %42, %cst_14 [1] : vector<8x512xf32> to vector<8xf32>
    %44 = vector.shape_cast %43 : vector<8xf32> to vector<8x1xf32>
    %c2_i32 = arith.constant 2 : i32
    %45 = vector.broadcast %c2_i32 : i32 to vector<8x4xi32>
    %46 = arith.cmpi eq, %19, %45 : vector<8x4xi32>
    %47 = vector.shape_cast %44 : vector<8x1xf32> to vector<8x1xf32>
    %48 = vector.broadcast %47 : vector<8x1xf32> to vector<8x4xf32>
    %49 = arith.select %46, %48, %38 : vector<8x4xi1>, vector<8x4xf32>
    %50 = vector.broadcast %44 : vector<8x1xf32> to vector<8x512xf32>
    %51 = arith.cmpf oeq, %42, %50 : vector<8x512xf32>
    %cst_15 = arith.constant 0xFF800000 : f32
    %52 = vector.broadcast %cst_15 : f32 to vector<8x512xf32>
    %53 = arith.select %51, %52, %42 : vector<8x512xi1>, vector<8x512xf32>
    %cst_16 = arith.constant dense<0xFF800000> : vector<8xf32>
    %54 = vector.multi_reduction <maximumf>, %53, %cst_16 [1] : vector<8x512xf32> to vector<8xf32>
    %55 = vector.shape_cast %54 : vector<8xf32> to vector<8x1xf32>
    %c3_i32 = arith.constant 3 : i32
    %56 = vector.broadcast %c3_i32 : i32 to vector<8x4xi32>
    %57 = arith.cmpi eq, %19, %56 : vector<8x4xi32>
    %58 = vector.shape_cast %55 : vector<8x1xf32> to vector<8x1xf32>
    %59 = vector.broadcast %58 : vector<8x1xf32> to vector<8x4xf32>
    %60 = arith.select %57, %59, %49 : vector<8x4xi1>, vector<8x4xf32>
    %c0_17 = arith.constant 0 : index
    %c0_18 = arith.constant 0 : index
    %61 = vector.load %arg6[%c0_17, %c0_18] : memref<8x4xf32, #tpu.memory_space<vmem>>, vector<8x4xf32>
    %62 = tpu.concatenate %61, %60 in 1 : vector<8x4xf32>, vector<8x4xf32> -> vector<8x8xf32>
    %cst_19 = arith.constant 0xFF800000 : f32
    %63 = vector.broadcast %cst_19 : f32 to vector<8x4xf32>
    %cst_20 = arith.constant dense<0xFF800000> : vector<8xf32>
    %64 = vector.multi_reduction <maximumf>, %62, %cst_20 [1] : vector<8x8xf32> to vector<8xf32>
    %65 = vector.shape_cast %64 : vector<8xf32> to vector<8x1xf32>
    %c0_i32_21 = arith.constant 0 : i32
    %66 = vector.broadcast %c0_i32_21 : i32 to vector<8x4xi32>
    %67 = arith.cmpi eq, %19, %66 : vector<8x4xi32>
    %68 = vector.shape_cast %65 : vector<8x1xf32> to vector<8x1xf32>
    %69 = vector.broadcast %68 : vector<8x1xf32> to vector<8x4xf32>
    %70 = arith.select %67, %69, %63 : vector<8x4xi1>, vector<8x4xf32>
    %71 = vector.broadcast %65 : vector<8x1xf32> to vector<8x8xf32>
    %72 = arith.cmpf oeq, %62, %71 : vector<8x8xf32>
    %cst_22 = arith.constant 0xFF800000 : f32
    %73 = vector.broadcast %cst_22 : f32 to vector<8x8xf32>
    %74 = arith.select %72, %73, %62 : vector<8x8xi1>, vector<8x8xf32>
    %cst_23 = arith.constant dense<0xFF800000> : vector<8xf32>
    %75 = vector.multi_reduction <maximumf>, %74, %cst_23 [1] : vector<8x8xf32> to vector<8xf32>
    %76 = vector.shape_cast %75 : vector<8xf32> to vector<8x1xf32>
    %c1_i32_24 = arith.constant 1 : i32
    %77 = vector.broadcast %c1_i32_24 : i32 to vector<8x4xi32>
    %78 = arith.cmpi eq, %19, %77 : vector<8x4xi32>
    %79 = vector.shape_cast %76 : vector<8x1xf32> to vector<8x1xf32>
    %80 = vector.broadcast %79 : vector<8x1xf32> to vector<8x4xf32>
    %81 = arith.select %78, %80, %70 : vector<8x4xi1>, vector<8x4xf32>
    %82 = vector.broadcast %76 : vector<8x1xf32> to vector<8x8xf32>
    %83 = arith.cmpf oeq, %74, %82 : vector<8x8xf32>
    %cst_25 = arith.constant 0xFF800000 : f32
    %84 = vector.broadcast %cst_25 : f32 to vector<8x8xf32>
    %85 = arith.select %83, %84, %74 : vector<8x8xi1>, vector<8x8xf32>
    %cst_26 = arith.constant dense<0xFF800000> : vector<8xf32>
    %86 = vector.multi_reduction <maximumf>, %85, %cst_26 [1] : vector<8x8xf32> to vector<8xf32>
    %87 = vector.shape_cast %86 : vector<8xf32> to vector<8x1xf32>
    %c2_i32_27 = arith.constant 2 : i32
    %88 = vector.broadcast %c2_i32_27 : i32 to vector<8x4xi32>
    %89 = arith.cmpi eq, %19, %88 : vector<8x4xi32>
    %90 = vector.shape_cast %87 : vector<8x1xf32> to vector<8x1xf32>
    %91 = vector.broadcast %90 : vector<8x1xf32> to vector<8x4xf32>
    %92 = arith.select %89, %91, %81 : vector<8x4xi1>, vector<8x4xf32>
    %93 = vector.broadcast %87 : vector<8x1xf32> to vector<8x8xf32>
    %94 = arith.cmpf oeq, %85, %93 : vector<8x8xf32>
    %cst_28 = arith.constant 0xFF800000 : f32
    %95 = vector.broadcast %cst_28 : f32 to vector<8x8xf32>
    %96 = arith.select %94, %95, %85 : vector<8x8xi1>, vector<8x8xf32>
    %cst_29 = arith.constant dense<0xFF800000> : vector<8xf32>
    %97 = vector.multi_reduction <maximumf>, %96, %cst_29 [1] : vector<8x8xf32> to vector<8xf32>
    %98 = vector.shape_cast %97 : vector<8xf32> to vector<8x1xf32>
    %c3_i32_30 = arith.constant 3 : i32
    %99 = vector.broadcast %c3_i32_30 : i32 to vector<8x4xi32>
    %100 = arith.cmpi eq, %19, %99 : vector<8x4xi32>
    %101 = vector.shape_cast %98 : vector<8x1xf32> to vector<8x1xf32>
    %102 = vector.broadcast %101 : vector<8x1xf32> to vector<8x4xf32>
    %103 = arith.select %100, %102, %92 : vector<8x4xi1>, vector<8x4xf32>
    %c0_31 = arith.constant 0 : index
    %c0_32 = arith.constant 0 : index
    %104 = vector.load %arg6[%c0_31, %c0_32] : memref<8x4xf32, #tpu.memory_space<vmem>>, vector<8x4xf32>
    tpu.vector_store %arg6[%c0_31, %c0_32], %103 {strides = array<i32>} : memref<8x4xf32, #tpu.memory_space<vmem>>, vector<8x4xf32>,
    %c1_i32_33 = arith.constant 1 : i32
    %105 = arith.cmpi eq, %arg1, %c1_i32_33 : i32
    %106 = arith.extui %105 : i1 to i32
    %c0_i32_34 = arith.constant 0 : i32
    %107 = arith.cmpi ne, %106, %c0_i32_34 : i32
    scf.if %107 {
      %108 = tpu.bitcast %103 : vector<8x4xf32> -> vector<8x4xi32>
      %c15_i32 = arith.constant 15 : i32
      %109 = vector.broadcast %c15_i32 : i32 to vector<8x4xi32>
      %110 = arith.andi %108, %109 : vector<8x4xi32>
      %c-16_i32_35 = arith.constant -16 : i32
      %111 = vector.broadcast %c-16_i32_35 : i32 to vector<8x4xi32>
      %112 = arith.andi %108, %111 : vector<8x4xi32>
      %113 = tpu.bitcast %112 : vector<8x4xi32> -> vector<8x4xf32>
      %cst_36 = arith.constant 14.2857141 : f32
      %114 = vector.broadcast %cst_36 : f32 to vector<8x4xf32>
      %115 = arith.mulf %113, %114 : vector<8x4xf32>
      %cst_37 = arith.constant dense<0xFF800000> : vector<8xf32>
      %116 = vector.multi_reduction <maximumf>, %115, %cst_37 [1] : vector<8x4xf32> to vector<8xf32>
      %117 = vector.shape_cast %116 : vector<8xf32> to vector<8x1xf32>
      %118 = vector.broadcast %117 : vector<8x1xf32> to vector<8x4xf32>
      %119 = arith.subf %115, %118 : vector<8x4xf32>
      %120 = math.exp %119 : vector<8x4xf32>
      %cst_38 = arith.constant dense<0.000000e+00> : vector<8xf32>
      %121 = vector.multi_reduction <add>, %120, %cst_38 [1] : vector<8x4xf32> to vector<8xf32>
      %122 = vector.shape_cast %121 : vector<8xf32> to vector<8x1xf32>
      %123 = tpu.reciprocal %122 {approx = true} : vector<8x1xf32> -> vector<8x1xf32>
      %124 = vector.broadcast %123 : vector<8x1xf32> to vector<8x4xf32>
      %125 = arith.mulf %120, %124 : vector<8x4xf32>
      %126 = tpu.iota {dimensions = array<i32: 1>} : vector<8x128xi32>
      %cst_39 = arith.constant 0.000000e+00 : f32
      %127 = vector.broadcast %cst_39 : f32 to vector<8x128xf32>
      %128 = vector.extract_strided_slice %110 {offsets = [0, 0], sizes = [8, 1], strides = [1, 1]} : vector<8x4xi32> to vector<8x1xi32>
      %129 = vector.broadcast %128 : vector<8x1xi32> to vector<8x128xi32>
      %130 = arith.cmpi eq, %129, %126 : vector<8x128xi32>
      %131 = arith.extui %130 : vector<8x128xi1> to vector<8x128xi32>
      %132 = arith.sitofp %131 : vector<8x128xi32> to vector<8x128xf32>
      %133 = vector.extract_strided_slice %125 {offsets = [0, 0], sizes = [8, 1], strides = [1, 1]} : vector<8x4xf32> to vector<8x1xf32>
      %134 = vector.broadcast %133 : vector<8x1xf32> to vector<8x128xf32>
      %135 = arith.mulf %134, %132 : vector<8x128xf32>
      %136 = arith.addf %127, %135 : vector<8x128xf32>
      %137 = vector.extract_strided_slice %110 {offsets = [0, 1], sizes = [8, 1], strides = [1, 1]} : vector<8x4xi32> to vector<8x1xi32>
      %138 = vector.broadcast %137 : vector<8x1xi32> to vector<8x128xi32>
      %139 = arith.cmpi eq, %138, %126 : vector<8x128xi32>
      %140 = arith.extui %139 : vector<8x128xi1> to vector<8x128xi32>
      %141 = arith.sitofp %140 : vector<8x128xi32> to vector<8x128xf32>
      %142 = vector.extract_strided_slice %125 {offsets = [0, 1], sizes = [8, 1], strides = [1, 1]} : vector<8x4xf32> to vector<8x1xf32>
      %143 = vector.broadcast %142 : vector<8x1xf32> to vector<8x128xf32>
      %144 = arith.mulf %143, %141 : vector<8x128xf32>
      %145 = arith.addf %136, %144 : vector<8x128xf32>
      %c0_40 = arith.constant 0 : index
      %c0_41 = arith.constant 0 : index
      %c0_42 = arith.constant 0 : index
      %146 = vector.load %arg5[%c0_40, %c0_41, %c0_42] : memref<2x8x128xf32, #tpu.memory_space<vmem>>, vector<1x8x128xf32>
      %147 = vector.shape_cast %146 : vector<1x8x128xf32> to vector<8x128xf32>
      %148 = vector.shape_cast %145 : vector<8x128xf32> to vector<1x8x128xf32>
      tpu.vector_store %arg5[%c0_40, %c0_41, %c0_42], %148 {strides = array<i32>} : memref<2x8x128xf32, #tpu.memory_space<vmem>>, vector<1x8x128xf32>,
      %149 = vector.extract_strided_slice %110 {offsets = [0, 2], sizes = [8, 1], strides = [1, 1]} : vector<8x4xi32> to vector<8x1xi32>
      %150 = vector.broadcast %149 : vector<8x1xi32> to vector<8x128xi32>
      %151 = arith.cmpi eq, %150, %126 : vector<8x128xi32>
      %152 = arith.extui %151 : vector<8x128xi1> to vector<8x128xi32>
      %153 = arith.sitofp %152 : vector<8x128xi32> to vector<8x128xf32>
      %154 = vector.extract_strided_slice %125 {offsets = [0, 2], sizes = [8, 1], strides = [1, 1]} : vector<8x4xf32> to vector<8x1xf32>
      %155 = vector.broadcast %154 : vector<8x1xf32> to vector<8x128xf32>
      %156 = arith.mulf %155, %153 : vector<8x128xf32>
      %157 = arith.addf %145, %156 : vector<8x128xf32>
      %158 = vector.extract_strided_slice %110 {offsets = [0, 3], sizes = [8, 1], strides = [1, 1]} : vector<8x4xi32> to vector<8x1xi32>
      %159 = vector.broadcast %158 : vector<8x1xi32> to vector<8x128xi32>
      %160 = arith.cmpi eq, %159, %126 : vector<8x128xi32>
      %161 = arith.extui %160 : vector<8x128xi1> to vector<8x128xi32>
      %162 = arith.sitofp %161 : vector<8x128xi32> to vector<8x128xf32>
      %163 = vector.extract_strided_slice %125 {offsets = [0, 3], sizes = [8, 1], strides = [1, 1]} : vector<8x4xf32> to vector<8x1xf32>
      %164 = vector.broadcast %163 : vector<8x1xf32> to vector<8x128xf32>
      %165 = arith.mulf %164, %162 : vector<8x128xf32>
      %166 = arith.addf %157, %165 : vector<8x128xf32>
      %c1 = arith.constant 1 : index
      %c0_43 = arith.constant 0 : index
      %c0_44 = arith.constant 0 : index
      %167 = vector.load %arg5[%c1, %c0_43, %c0_44] : memref<2x8x128xf32, #tpu.memory_space<vmem>>, vector<1x8x128xf32>
      %168 = vector.shape_cast %167 : vector<1x8x128xf32> to vector<8x128xf32>
      %169 = vector.shape_cast %166 : vector<8x128xf32> to vector<1x8x128xf32>
      tpu.vector_store %arg5[%c1, %c0_43, %c0_44], %169 {strides = array<i32>} : memref<2x8x128xf32, #tpu.memory_space<vmem>>, vector<1x8x128xf32>,
    } else {
    }
    return
  }
  func.func @transform_0(%arg0: i32, %arg1: i32) -> (i32, i32) {
    %c0_i32 = arith.constant 0 : i32
    %c0_i32_0 = arith.constant 0 : i32
    return %arg0, %c0_i32 : i32, i32
  }
  func.func @transform_1(%arg0: i32, %arg1: i32) -> (i32, i32) {
    %c0_i32 = arith.constant 0 : i32
    %c0_i32_0 = arith.constant 0 : i32
    return %c0_i32, %arg1 : i32, i32
  }
  func.func @transform_2(%arg0: i32, %arg1: i32) -> (i32, i32) {
    %c0_i32 = arith.constant 0 : i32
    %c0_i32_0 = arith.constant 0 : i32
    return %c0_i32, %arg1 : i32, i32
  }
  func.func @transform_3(%arg0: i32, %arg1: i32) -> (i32, i32, i32) {
    %c0_i32 = arith.constant 0 : i32
    %c0_i32_0 = arith.constant 0 : i32
    %c0_i32_1 = arith.constant 0 : i32
    return %c0_i32, %arg0, %c0_i32_0 : i32, i32, i32
  }
}

</mosaic_0001>

<llo_original>
// kernel: knn_forward.1
$region0: #{knn_forward.1}
  #allocation0 [shape = 'u32[]', space=smem, size = 0x4, offset = 0x4, fixed_abs, tag = 'smem constant byte address 0x4 - core index']
  #allocation1 [shape = 'u32[72,128]{1,0:T(1,128)}', space=vmem, size = 0x9000, scoped, tag = 'internal scratch']
  #allocation2 [shape = 'f32[8,4]{1,0:T(8,128)}', space=vmem, size = 0x1000, scoped, tag = 'scratch operand']
  %s0 = inlined_call_operand.vmem [shape: bf16[16,32], index: 0, kind: input, shape index: {}]
  %s1 = inlined_call_operand.hbm [shape: bf16[32,1024], index: 1, kind: input, shape index: {}]
  %s2 = inlined_call_operand.vmem [shape: s32[1,1024], index: 2, kind: input, shape index: {}]
  %s3 = inlined_call_operand.vmem [shape: f32[2,16,128], index: 3, kind: output, shape index: {}]
  %s4 = sld [smem:[#allocation0]]
  $region91: #{knn_forward.1} parent=0
    _
  %s6 = ssub.s32 1, %s4
  %s7 = scalar_select 0, %s6, %s4
  $region1: #{knn_forward.1} parent=0
    #allocation3 [shape = 'u8[65536]{0}', space=vmem, size = 0x10000, scoped, tag = 'input window, operand 1']
    #allocation4 [shape = 's32[2]{0}', space=sflag, size = 0x8, scoped, tag = 'scoped memory for knn_forward.1']
    #allocation5 [shape = 'u8[16384]{0}', space=vmem, size = 0x4000, scoped, tag = 'output window, operand 0']
    %8 = vsyncpa [#allocation4], 0
    %s9 = scalar_lea.sflag [#allocation4], 1
    %10 = vsyncpa %s9, 0
    loop: start=0, step=1, limit=6
    $region2: #{knn_forward.1} parent=1 // loop_pre_header
      _
    $region3: #{knn_forward.1} parent=1 // loop_header
      %s12 = sphi 0, %s16
      %p13 = scmp.ge.s32.totalorder %s12, 6
      %s19 = sphi 0, %s31
      %s20 = sphi 0, %s27
      %s21 = sphi 0, %s19
      %s22 = sphi 0, %s20
      %s23 = sphi 0, %s21
      %s24 = sphi 0, %s22
      %s34 = sphi 0, %s36
      %s37 = sphi 0, %s34
      %s38 = sphi 0, %s37
      %s54 = sphi 0, %s38
      %s60 = sphi 0, %s62
      %s63 = sphi 0, %s60
      %s64 = sphi 0, %s63
      %s80 = sphi 0, %s64
      %s86 = sphi 0, %s88
      %s89 = sphi 0, %s86
      %s90 = sphi 0, %s89
      %s106 = sphi 0, %s90
      %s112 = sphi 0, %s114
      %s115 = sphi 0, %s112
      %s116 = sphi 0, %s115
      %s132 = sphi 0, %s116
    $region4: #{knn_forward.1} parent=1 // loop_header_branch
      %15 = sbr.rel (%p13) target = $region8
    $region5: #{knn_forward.1} parent=1 // loop_body
      %s17 = ssub.s32 %s12, 1
      %s18 = ssub.s32 %s12, 2
      %s25 = sadd.s32 1, %s20
      %p26 = scmp.ge.s32.totalorder %s25, 2
      %s27 = scalar_select %p26, 0, %s25
      %s28 = sadd.s32 1, %s19
      %s29 = scalar_select %p26, %s28, %s19
      %p30 = scmp.ge.s32.totalorder %s29, 2
      %s31 = scalar_select %p30, 0, %s29
      %s32 = ssub.s32 %s19, %s31
      %p33 = scmp.eq.s32.totalorder %s32, 0
      %s35 = sadd.s32 %s34, 1
      %s36 = scalar_select %p33, %s34, %s35
      %p39 = pneg %p33
      %p40 = scmp.eq.s32.totalorder %s12, 3
      %p41 = por %p39, %p40
      %p42 = scmp.ne.s32.totalorder %s34, %s37
      %p43 = scmp.eq.s32.totalorder %s12, 0
      %p44 = por %p42, %p43
      %p45 = scmp.ne.s32.totalorder %s34, %s37
      %p46 = scmp.eq.s32.totalorder %s17, 3
      %p47 = por %p45, %p46
      %p48 = scmp.ne.s32.totalorder %s37, %s38
      %p49 = scmp.eq.s32.totalorder %s17, 0
      %p50 = por %p48, %p49
      %p51 = scmp.ne.s32.totalorder %s37, %s38
      %p52 = scmp.eq.s32.totalorder %s18, 3
      %p53 = por %p51, %p52
      %p55 = scmp.ne.s32.totalorder %s38, %s54
      %p56 = scmp.eq.s32.totalorder %s18, 0
      %p57 = por %p55, %p56
      %s58 = ssub.s32 %s20, %s27
      %p59 = scmp.eq.s32.totalorder %s58, 0
      %s61 = sadd.s32 %s60, 1
      %s62 = scalar_select %p59, %s60, %s61
      %p65 = pneg %p59
      %p66 = scmp.eq.s32.totalorder %s12, 3
      %p67 = por %p65, %p66
      %p68 = scmp.ne.s32.totalorder %s60, %s63
      %p69 = scmp.eq.s32.totalorder %s12, 0
      %p70 = por %p68, %p69
      %p71 = scmp.ne.s32.totalorder %s60, %s63
      %p72 = scmp.eq.s32.totalorder %s17, 3
      %p73 = por %p71, %p72
      %p74 = scmp.ne.s32.totalorder %s63, %s64
      %p75 = scmp.eq.s32.totalorder %s17, 0
      %p76 = por %p74, %p75
      %p77 = scmp.ne.s32.totalorder %s63, %s64
      %p78 = scmp.eq.s32.totalorder %s18, 3
      %p79 = por %p77, %p78
      %p81 = scmp.ne.s32.totalorder %s64, %s80
      %p82 = scmp.eq.s32.totalorder %s18, 0
      %p83 = por %p81, %p82
      %s84 = ssub.s32 %s20, %s27
      %p85 = scmp.eq.s32.totalorder %s84, 0
      %s87 = sadd.s32 %s86, 1
      %s88 = scalar_select %p85, %s86, %s87
      %p91 = pneg %p85
      %p92 = scmp.eq.s32.totalorder %s12, 3
      %p93 = por %p91, %p92
      %p94 = scmp.ne.s32.totalorder %s86, %s89
      %p95 = scmp.eq.s32.totalorder %s12, 0
      %p96 = por %p94, %p95
      %p97 = scmp.ne.s32.totalorder %s86, %s89
      %p98 = scmp.eq.s32.totalorder %s17, 3
      %p99 = por %p97, %p98
      %p100 = scmp.ne.s32.totalorder %s89, %s90
      %p101 = scmp.eq.s32.totalorder %s17, 0
      %p102 = por %p100, %p101
      %p103 = scmp.ne.s32.totalorder %s89, %s90
      %p104 = scmp.eq.s32.totalorder %s18, 3
      %p105 = por %p103, %p104
      %p107 = scmp.ne.s32.totalorder %s90, %s106
      %p108 = scmp.eq.s32.totalorder %s18, 0
      %p109 = por %p107, %p108
      %s110 = ssub.s32 %s19, %s31
      %p111 = scmp.eq.s32.totalorder %s110, 0
      %s113 = sadd.s32 %s112, 1
      %s114 = scalar_select %p111, %s112, %s113
      %p117 = pneg %p111
      %p118 = scmp.eq.s32.totalorder %s12, 3
      %p119 = por %p117, %p118
      %p120 = scmp.ne.s32.totalorder %s112, %s115
      %p121 = scmp.eq.s32.totalorder %s12, 0
      %p122 = por %p120, %p121
      %p123 = scmp.ne.s32.totalorder %s112, %s115
      %p124 = scmp.eq.s32.totalorder %s17, 3
      %p125 = por %p123, %p124
      %p126 = scmp.ne.s32.totalorder %s115, %s116
      %p127 = scmp.eq.s32.totalorder %s17, 0
      %p128 = por %p126, %p127
      %p129 = scmp.ne.s32.totalorder %s115, %s116
      %p130 = scmp.eq.s32.totalorder %s18, 3
      %p131 = por %p129, %p130
      %p133 = scmp.ne.s32.totalorder %s116, %s132
      %p134 = scmp.eq.s32.totalorder %s18, 0
      %p135 = por %p133, %p134
      %p136 = scmp.le.s32.totalorder 1, %s12
      %p137 = scmp.lt.s32.totalorder %s12, 5
      %p138 = pnand %p136, %p137
      %p139 = pneg %p138
      // Predicated region
      $region9: #{knn_forward.1} parent=5 // pred_check
        _
      $region10: #{knn_forward.1} parent=5 // pred_check_branch
        %141 = sbr.rel (%p138) target = $region12
      $region11: #{knn_forward.1} parent=5 // pred_region
        %s142 = ssub.s32 %s12, 1
      $region12: #{knn_forward.1} parent=5 // pred_fallthru
        _
      %p143 = scmp.lt.s32.totalorder %s12, 4
      // Predicated region
      $region13: #{knn_forward.1} parent=5 // pred_check
        %p144 = pneg %p143
      $region14: #{knn_forward.1} parent=5 // pred_check_branch
        %146 = sbr.rel (%p144) target = $region16
      $region15: #{knn_forward.1} parent=5 // pred_region
        // Predicated region
        $region17: #{knn_forward.1} parent=15 // pred_check
          %p147 = pneg %p44
        $region18: #{knn_forward.1} parent=15 // pred_check_branch
          %149 = sbr.rel (%p147) target = $region20
        $region19: #{knn_forward.1} parent=15 // pred_region
          %p150 = scmp.lt.s32.totalorder %s19, 1
          %s151 = scalar_select %p150, %s19, 1
          %s152 = smul.addr %s151, 4
          %s153 = scalar_lea.vmem %s0, %s152
        $region20: #{knn_forward.1} parent=15 // pred_fallthru
          _
        // Predicated region
        $region21: #{knn_forward.1} parent=15 // pred_check
          %p154 = pneg %p70
        $region22: #{knn_forward.1} parent=15 // pred_check_branch
          %156 = sbr.rel (%p154) target = $region24
        $region23: #{knn_forward.1} parent=15 // pred_region
          %s157 = sand.u32 %s60, 1
          %s158 = scalar_lea.sflag [#allocation4], %s157
          %s159 = sand.u32 %s60, 1
          %s160 = smul.addr %s159, 64
          %s161 = scalar_lea.vmem [#allocation3], %s160
          %s162 = smul.u32 4, %s20
          %164 = vsyncadd %s158, 0
          %s165 = smul.addr %s162, 4
          %s166 = scalar_lea.hbm %s1, %s165
          %s167 = sshll.u32 %s166, 4
          %s168 = int_to_ptr.hbm [resolvable:$true] %s167
          %s169 = sshll.u32 %s161, 4
          %s170 = int_to_ptr.vmem [resolvable:$true] %s169
          %175 = dma.hbm_to_vmem [thread:$0]  %s168, 1024, %s170, %s158, 512, 256, 16
        $region24: #{knn_forward.1} parent=15 // pred_fallthru
          _
        // Predicated region
        $region25: #{knn_forward.1} parent=15 // pred_check
          %p176 = pneg %p96
        $region26: #{knn_forward.1} parent=15 // pred_check_branch
          %178 = sbr.rel (%p176) target = $region28
        $region27: #{knn_forward.1} parent=15 // pred_region
          %s179 = smul.u32 4, %s20
          %p180 = scmp.lt.s32.totalorder %s179, 7
          %s181 = scalar_select %p180, %s179, 7
          %s182 = scalar_lea.vmem %s2, %s181
          %s183 = smul.u32 4, %s20
        $region28: #{knn_forward.1} parent=15 // pred_fallthru
          _
      $region16: #{knn_forward.1} parent=5 // pred_fallthru
        _
      %p184 = scmp.le.s32.totalorder 1, %s12
      %p185 = scmp.lt.s32.totalorder %s12, 5
      %p186 = pnand %p184, %p185
      %p187 = pneg %p186
      // Predicated region
      $region29: #{knn_forward.1} parent=5 // pred_check
        _
      $region30: #{knn_forward.1} parent=5 // pred_check_branch
        %189 = sbr.rel (%p186) target = $region32
      $region31: #{knn_forward.1} parent=5 // pred_region
        %s190 = ssub.s32 %s12, 1
        %s191 = sand.u32 %s63, 1
        %s192 = scalar_lea.sflag [#allocation4], %s191
        %s193 = sand.u32 %s63, 1
        %s194 = smul.addr %s193, 64
        %s195 = scalar_lea.vmem [#allocation3], %s194
        // Predicated region
        $region33: #{knn_forward.1} parent=31 // pred_check
          %p196 = pneg %p76
        $region34: #{knn_forward.1} parent=31 // pred_check_branch
          %198 = sbr.rel (%p196) target = $region36
        $region35: #{knn_forward.1} parent=31 // pred_region
          %200 = dma.done %s192, 1024
        $region36: #{knn_forward.1} parent=31 // pred_fallthru
          _
        %p201 = scmp.lt.s32.totalorder %s21, 1
        %s202 = scalar_select %p201, %s21, 1
        %s203 = smul.addr %s202, 4
        %s204 = scalar_lea.vmem %s0, %s203
        %p205 = pneg %p50
        %p206 = pneg %p47
        %s207 = sand.u32 %s63, 1
        %s208 = scalar_lea.sflag [#allocation4], %s207
        %s209 = sand.u32 %s63, 1
        %s210 = smul.addr %s209, 64
        %s211 = scalar_lea.vmem [#allocation3], %s210
        %p212 = pneg %p76
        %p213 = pneg %p73
        %s214 = smul.u32 4, %s22
        %p215 = scmp.lt.s32.totalorder %s214, 7
        %s216 = scalar_select %p215, %s214, 7
        %s217 = scalar_lea.vmem %s2, %s216
        %p218 = pneg %p102
        %p219 = pneg %p99
        %p220 = pneg %p128
        %p221 = pneg %p125
        %s222 = sand.u32 %s115, 1
        %s223 = sand.u32 %s115, 1
        %s224 = smul.addr %s223, 16
        %s225 = scalar_lea.vmem [#allocation5], %s224
        %p226 = scmp.lt.s32.totalorder %s21, 1
        %s227 = scalar_select %p226, %s21, 1
        %s228 = smul.addr %s227, 4
        %s229 = scalar_lea.vmem %s0, %s228
        %s230 = smul.u32 4, %s22
        %s231 = smul.u32 4, %s22
        %p232 = scmp.lt.s32.totalorder %s231, 7
        %s233 = scalar_select %p232, %s231, 7
        %s234 = scalar_lea.vmem %s2, %s233
        %s235 = smul.u32 4, %s22
        %p237 = scmp.eq.s32.totalorder %s22, 0
        // Predicated region
        $region37: #{knn_forward.1} parent=31 // pred_check
          %p238 = pneg %p237
        $region38: #{knn_forward.1} parent=31 // pred_check_branch
          %240 = sbr.rel (%p238) target = $region40
        $region39: #{knn_forward.1} parent=31 // pred_region
          %vm241 = vcmask 31744
          %242 = vst.msk [vmem:[#allocation2] sm:$0xff] %vm241, -inf
        $region40: #{knn_forward.1} parent=31 // pred_fallthru
          _
        %v243 = vld [vmem:[%s229] sm:$0xf]
        %v244 = vld [vmem:[%s195] sm:$0xff]
        %v245 = vld [vmem:[%s195 + $0x8] sm:$0xff]
        %v246 = vld [vmem:[%s195 + $0x10] sm:$0xff]
        %v247 = vld [vmem:[%s195 + $0x18] sm:$0xff]
        %v248 = vld [vmem:[%s195 + $0x20] sm:$0xff]
        %v249 = vld [vmem:[%s195 + $0x28] sm:$0xff]
        %v250 = vld [vmem:[%s195 + $0x30] sm:$0xff]
        %v251 = vld [vmem:[%s195 + $0x38] sm:$0xff]
        %v260 = vunpack.c.l.b16 %v244
        %v261 = vunpack.c.h.b16 %v244
        %v262 = vunpack.c.l.b16 %v245
        %v263 = vunpack.c.h.b16 %v245
        %v264 = vunpack.c.l.b16 %v246
        %v265 = vunpack.c.h.b16 %v246
        %v266 = vunpack.c.l.b16 %v247
        %v267 = vunpack.c.h.b16 %v247
        %v268 = vunpack.c.l.b16 %v248
        %v269 = vunpack.c.h.b16 %v248
        %v270 = vunpack.c.l.b16 %v249
        %v271 = vunpack.c.h.b16 %v249
        %v272 = vunpack.c.l.b16 %v250
        %v273 = vunpack.c.h.b16 %v250
        %v274 = vunpack.c.l.b16 %v251
        %v275 = vunpack.c.h.b16 %v251
        %v276 = vpack.c.b16 %v264, %v260
        %v277 = vpack.c.b16 %v265, %v261
        %v278 = vpack.c.b16 %v266, %v262
        %v279 = vpack.c.b16 %v267, %v263
        %v280 = vpack.c.b16 %v272, %v268
        %v281 = vpack.c.b16 %v273, %v269
        %v282 = vpack.c.b16 %v274, %v270
        %v283 = vpack.c.b16 %v275, %v271
        %vm292 = vcmask 261120
        %v294 = vsel %vm292, %v243, 0
        %296 = vmatpush.bf16.msra.mxu0 0
        %297 = vmatpush.bf16.msra.mxu0 0
        %298 = vmatpush.bf16.msra.mxu0 0
        %299 = vmatpush.bf16.msra.mxu0 0
        %300 = vmatpush.bf16.msra.mxu0 0
        %301 = vmatpush.bf16.msra.mxu0 0
        %302 = vmatpush.bf16.msra.mxu0 %v280
        %303 = vmatpush.bf16.msra.mxu0 %v276
        %304 = vmatmul.bf16.gmra.mxu0 %v294
        %v305 = vpop.f32.mrf.mxu0
        %v306 = vadd.f32 0.0, %v305
        %v307 = vpop.f32.mrf.mxu0
        %308 = vdwg.mxu0
        %309 = vmatpush.bf16.msra.mxu0 0
        %310 = vmatpush.bf16.msra.mxu0 0
        %311 = vmatpush.bf16.msra.mxu0 0
        %312 = vmatpush.bf16.msra.mxu0 0
        %313 = vmatpush.bf16.msra.mxu0 0
        %314 = vmatpush.bf16.msra.mxu0 0
        %315 = vmatpush.bf16.msra.mxu0 %v281
        %316 = vmatpush.bf16.msra.mxu0 %v277
        %317 = vmatmul.bf16.gmra.mxu0 %v294
        %v318 = vpop.f32.mrf.mxu0
        %v319 = vadd.f32 0.0, %v318
        %v320 = vpop.f32.mrf.mxu0
        %321 = vdwg.mxu0
        %322 = vmatpush.bf16.msra.mxu0 0
        %323 = vmatpush.bf16.msra.mxu0 0
        %324 = vmatpush.bf16.msra.mxu0 0
        %325 = vmatpush.bf16.msra.mxu0 0
        %326 = vmatpush.bf16.msra.mxu0 0
        %327 = vmatpush.bf16.msra.mxu0 0
        %328 = vmatpush.bf16.msra.mxu0 %v282
        %329 = vmatpush.bf16.msra.mxu0 %v278
        %330 = vmatmul.bf16.gmra.mxu0 %v294
        %v331 = vpop.f32.mrf.mxu0
        %v332 = vadd.f32 0.0, %v331
        %v333 = vpop.f32.mrf.mxu0
        %334 = vdwg.mxu0
        %335 = vmatpush.bf16.msra.mxu0 0
        %336 = vmatpush.bf16.msra.mxu0 0
        %337 = vmatpush.bf16.msra.mxu0 0
        %338 = vmatpush.bf16.msra.mxu0 0
        %339 = vmatpush.bf16.msra.mxu0 0
        %340 = vmatpush.bf16.msra.mxu0 0
        %341 = vmatpush.bf16.msra.mxu0 %v283
        %342 = vmatpush.bf16.msra.mxu0 %v279
        %343 = vmatmul.bf16.gmra.mxu0 %v294
        %v344 = vpop.f32.mrf.mxu0
        %v345 = vadd.f32 0.0, %v344
        %v346 = vpop.f32.mrf.mxu0
        %347 = vdwg.mxu0
        %v348 = vld [vmem:[%s234] sm:$0xf]
        %v353 = vand.u32 %v306, 4294967280
        %v354 = vand.u32 %v319, 4294967280
        %v355 = vand.u32 %v332, 4294967280
        %v356 = vand.u32 %v345, 4294967280
        %v357 = vperm.slane %v348, 0
        %v358 = vperm.slane %v348, 1
        %v359 = vperm.slane %v348, 2
        %v360 = vperm.slane %v348, 3
        %v361 = vor.u32 %v353, %v357
        %v362 = vor.u32 %v354, %v358
        %v363 = vor.u32 %v355, %v359
        %v364 = vor.u32 %v356, %v360
        %vm369 = vcmp.ge.s32.totalorder %v348, 0
        %v370 = vsel %vm369, 1, 0
        %v371 = vperm.slane %v370, 0
        %v372 = vperm.slane %v370, 1
        %v373 = vperm.slane %v370, 2
        %v374 = vperm.slane %v370, 3
        %vm375 = vcmp.eq.s32.totalorder %v371, 1
        %vm376 = vcmp.eq.s32.totalorder %v372, 1
        %vm377 = vcmp.eq.s32.totalorder %v373, 1
        %vm378 = vcmp.eq.s32.totalorder %v374, 1
        %v379 = vsel %vm375, %v361, -inf
        %v380 = vsel %vm376, %v362, -inf
        %v381 = vsel %vm377, %v363, -inf
        %v382 = vsel %vm378, %v364, -inf
        %v383 = vlaneseq
        %v384 = vand.u32 %v383, 127
        %v385 = vmax.f32 %v379, %v380
        %v386 = vmax.f32 %v381, %v382
        %v387 = vmax.f32 %v385, %v386
        %388 = vmax.xlane.f32.xlu0 %v387
        %v389 = vpop.xlane.xlu0 %388
        %vm390 = vcmp.eq.s32.totalorder %v384, 0
        %v391 = vsel %vm390, %v389, -inf
        %vm392 = vcmp.eq.f32.partialorder %v379, %v389
        %vm393 = vcmp.eq.f32.partialorder %v380, %v389
        %vm394 = vcmp.eq.f32.partialorder %v381, %v389
        %vm395 = vcmp.eq.f32.partialorder %v382, %v389
        %v396 = vsel %vm392, -inf, %v379
        %v397 = vsel %vm393, -inf, %v380
        %v398 = vsel %vm394, -inf, %v381
        %v399 = vsel %vm395, -inf, %v382
        %v400 = vmax.f32 %v396, %v397
        %v401 = vmax.f32 %v398, %v399
        %v402 = vmax.f32 %v400, %v401
        %403 = vmax.xlane.f32.xlu0 %v402
        %v404 = vpop.xlane.xlu0 %403
        %vm405 = vcmp.eq.s32.totalorder %v384, 1
        %v406 = vsel %vm405, %v404, %v391
        %vm407 = vcmp.eq.f32.partialorder %v396, %v404
        %vm408 = vcmp.eq.f32.partialorder %v397, %v404
        %vm409 = vcmp.eq.f32.partialorder %v398, %v404
        %vm410 = vcmp.eq.f32.partialorder %v399, %v404
        %v411 = vsel %vm407, -inf, %v396
        %v412 = vsel %vm408, -inf, %v397
        %v413 = vsel %vm409, -inf, %v398
        %v414 = vsel %vm410, -inf, %v399
        %v415 = vmax.f32 %v411, %v412
        %v416 = vmax.f32 %v413, %v414
        %v417 = vmax.f32 %v415, %v416
        %418 = vmax.xlane.f32.xlu0 %v417
        %v419 = vpop.xlane.xlu0 %418
        %vm420 = vcmp.eq.s32.totalorder %v384, 2
        %v421 = vsel %vm420, %v419, %v406
        %vm422 = vcmp.eq.f32.partialorder %v411, %v419
        %vm423 = vcmp.eq.f32.partialorder %v412, %v419
        %vm424 = vcmp.eq.f32.partialorder %v413, %v419
        %vm425 = vcmp.eq.f32.partialorder %v414, %v419
        %v426 = vsel %vm422, -inf, %v411
        %v427 = vsel %vm423, -inf, %v412
        %v428 = vsel %vm424, -inf, %v413
        %v429 = vsel %vm425, -inf, %v414
        %v430 = vmax.f32 %v426, %v427
        %v431 = vmax.f32 %v428, %v429
        %v432 = vmax.f32 %v430, %v431
        %433 = vmax.xlane.f32.xlu0 %v432
        %v434 = vpop.xlane.xlu0 %433
        %vm435 = vcmp.eq.s32.totalorder %v384, 3
        %v436 = vsel %vm435, %v434, %v421
        %v437 = vld [vmem:[#allocation2] sm:$0xff]
        %439 = vrot.lane.b32.xlu0 %v436, 4
        %v440 = vpop.permute.xlu0 %439
        %vm442 = vcmask 31744
        %v443 = vsel %vm442, %v437, %v440
        %vm444 = vcmask 64512
        %v445 = vsel %vm444, %v443, -inf
        %446 = vmax.xlane.f32.xlu0 %v445
        %v447 = vpop.xlane.xlu0 %446
        %v448 = vsel %vm390, %v447, -inf
        %vm449 = vcmp.eq.f32.partialorder %v443, %v447
        %v450 = vsel %vm449, -inf, %v443
        %v451 = vsel %vm444, %v450, -inf
        %452 = vmax.xlane.f32.xlu0 %v451
        %v453 = vpop.xlane.xlu0 %452
        %v454 = vsel %vm405, %v453, %v448
        %vm455 = vcmp.eq.f32.partialorder %v450, %v453
        %v456 = vsel %vm455, -inf, %v450
        %v457 = vsel %vm444, %v456, -inf
        %458 = vmax.xlane.f32.xlu0 %v457
        %v459 = vpop.xlane.xlu0 %458
        %v460 = vsel %vm420, %v459, %v454
        %vm461 = vcmp.eq.f32.partialorder %v456, %v459
        %v462 = vsel %vm461, -inf, %v456
        %v463 = vsel %vm444, %v462, -inf
        %464 = vmax.xlane.f32.xlu0 %v463
        %v465 = vpop.xlane.xlu0 %464
        %v466 = vsel %vm435, %v465, %v460
        %467 = vst.msk [vmem:[#allocation2] sm:$0xff] %vm442, %v466
        %p468 = scmp.eq.s32.totalorder %s22, 1
        // Predicated region
        $region41: #{knn_forward.1} parent=31 // pred_check
          %p469 = pneg %p468
        $region42: #{knn_forward.1} parent=31 // pred_check_branch
          %471 = sbr.rel (%p469) target = $region44
        $region43: #{knn_forward.1} parent=31 // pred_region
          %v473 = vand.u32 %v466, 15
          %v474 = vand.u32 %v466, 4294967280
          %v476 = vmul.f32 %v474, 14.285714
          %v477 = vsel %vm442, %v476, -inf
          %478 = vmax.xlane.f32.xlu0 %v477
          %v479 = vpop.xlane.xlu0 %478
          %v480 = vsub.f32 %v476, %v479
          %v481 = vmul.f32 %v480, 1.442695
          %v482 = vpow.pop %v481
          %v483 = vsel %vm442, %v482, 0.0
          %484 = vadd.xlane.f32.xlu0 %v483
          %v485 = vpop.xlane.xlu0 %484
          %v486 = vrcp.pop %v485
          %v487 = vmul.f32 %v482, %v486
          %488 = vset.pattern.permute.xlu0 0
          %489 = vperm.xlu0 %488, %v473
          %v490 = vpop.permute.xlu0 %489
          %vm491 = vcmp.eq.s32.totalorder %v490, %v384
          %v492 = vsel %vm491, 1, 0
          %v493 = vcvt.s32.f32 %v492
          %495 = vset.pattern.permute.xlu0 0
          %496 = vperm.xlu0 %495, %v487
          %v497 = vpop.permute.xlu0 %496
          %v499 = vmul.f32 %v497, %v493
          %v500 = vadd.f32 %v499, 0.0
          %501 = vset.pattern.permute.xlu0 1
          %502 = vperm.xlu0 %501, %v473
          %v503 = vpop.permute.xlu0 %502
          %vm504 = vcmp.eq.s32.totalorder %v503, %v384
          %v505 = vsel %vm504, 1, 0
          %v506 = vcvt.s32.f32 %v505
          %507 = vset.pattern.permute.xlu0 1
          %508 = vperm.xlu0 %507, %v487
          %v509 = vpop.permute.xlu0 %508
          %v511 = vmul.f32 %v509, %v506
          %v512 = vadd.f32 %v500, %v511
          %513 = vst [vmem:[%s225] sm:$0xff] %v512
          %514 = vset.pattern.permute.xlu0 2
          %515 = vperm.xlu0 %514, %v473
          %v516 = vpop.permute.xlu0 %515
          %vm517 = vcmp.eq.s32.totalorder %v516, %v384
          %v518 = vsel %vm517, 1, 0
          %v519 = vcvt.s32.f32 %v518
          %520 = vset.pattern.permute.xlu0 2
          %521 = vperm.xlu0 %520, %v487
          %v522 = vpop.permute.xlu0 %521
          %v524 = vmul.f32 %v522, %v519
          %v525 = vadd.f32 %v512, %v524
          %526 = vset.pattern.permute.xlu0 3
          %527 = vperm.xlu0 %526, %v473
          %v528 = vpop.permute.xlu0 %527
          %vm529 = vcmp.eq.s32.totalorder %v528, %v384
          %v530 = vsel %vm529, 1, 0
          %v531 = vcvt.s32.f32 %v530
          %532 = vset.pattern.permute.xlu0 3
          %533 = vperm.xlu0 %532, %v487
          %v534 = vpop.permute.xlu0 %533
          %v536 = vmul.f32 %v534, %v531
          %v537 = vadd.f32 %v525, %v536
          %s538 = scalar_lea.vmem %s225, 8 [#allocation5]
          %539 = vst [vmem:[%s538] sm:$0xff] %v537
        $region44: #{knn_forward.1} parent=31 // pred_fallthru
          _
        %s540 = sand.u32 %s115, 1
        %s541 = sand.u32 %s115, 1
        %s542 = smul.addr %s541, 16
        %s543 = scalar_lea.vmem [#allocation5], %s542
        // Predicated region
        $region45: #{knn_forward.1} parent=31 // pred_check
          %p544 = pneg %p125
        $region46: #{knn_forward.1} parent=31 // pred_check_branch
          %546 = sbr.rel (%p544) target = $region48
        $region47: #{knn_forward.1} parent=31 // pred_region
          %s547 = smul.addr %s21, 8
          %s548 = scalar_lea.vmem %s3, %s547
          // Predicated region
          $region49: #{knn_forward.1} parent=47 // pred_check
            _
          $region50: #{knn_forward.1} parent=47 // pred_check_branch
            %550 = sbr.rel (0) target = $region52
          $region51: #{knn_forward.1} parent=47 // pred_region
            // Predicated region
            $region53: #{knn_forward.1} parent=51 // pred_check
              _
            $region54: #{knn_forward.1} parent=51 // pred_check_branch
              %552 = sbr.rel (0) target = $region56
            $region55: #{knn_forward.1} parent=51 // pred_region
              // Predicated region
              $region68: #{knn_forward.1} parent=55 // pred_check
                _
              $region69: #{knn_forward.1} parent=55 // pred_check_branch
                %570 = sbr.rel (0) target = $region71
              $region70: #{knn_forward.1} parent=55 // pred_region
                loop: start=0, step=1, limit=1
                $region72: #{knn_forward.1} parent=70 // loop_pre_header
                  _
                $region73: #{knn_forward.1} parent=70 // loop_header
                  %s572 = sphi 0, %s576
                  %p573 = scmp.ge.s32.totalorder %s572, 1
                  %s577 = sphi %s543, %s543
                  %s578 = sphi %s548, %s548
                $region74: #{knn_forward.1} parent=70 // loop_header_branch
                  %575 = sbr.rel (%p573) target = $region78
                $region75: #{knn_forward.1} parent=70 // loop_body
                  %v579 = vld [vmem:[%s577] sm:$0xff]
                  %580 = vst [vmem:[%s578] sm:$0xff] %v579
                  %v581 = vld [vmem:[%s577 + $0x8] sm:$0xff]
                  %582 = vst [vmem:[%s578 + $0x10] sm:$0xff] %v581
                $region76: #{knn_forward.1} parent=70 // loop_footer
                  %s576 = sadd.s32 1, %s572
                $region77: #{knn_forward.1} parent=70 // loop_footer_branch
                  %571 = sbr.rel target = $region73
                $region78: #{knn_forward.1} parent=70 // loop_exit
                  _
              $region71: #{knn_forward.1} parent=55 // pred_fallthru
                _
              // Predicated region
              $region79: #{knn_forward.1} parent=55 // pred_check
                _
              $region80: #{knn_forward.1} parent=55 // pred_check_branch
                %584 = sbr.rel target = $region82
              $region81: #{knn_forward.1} parent=55 // pred_region
                _
              $region82: #{knn_forward.1} parent=55 // pred_fallthru
                _
            $region56: #{knn_forward.1} parent=51 // pred_fallthru
              _
            // Predicated region
            $region57: #{knn_forward.1} parent=51 // pred_check
              _
            $region58: #{knn_forward.1} parent=51 // pred_check_branch
              %554 = sbr.rel target = $region60
            $region59: #{knn_forward.1} parent=51 // pred_region
              %s556 = ssub.s32 256, 1
              loop: start=0, step=1, limit=1
              $region61: #{knn_forward.1} parent=59 // loop_pre_header
                _
              $region62: #{knn_forward.1} parent=59 // loop_header
                %s558 = sphi 0, %s562
                %p559 = scmp.ge.s32.totalorder %s558, 1
                %s563 = sphi %s543, %s543
                %s564 = sphi %s548, %s548
              $region63: #{knn_forward.1} parent=59 // loop_header_branch
                %561 = sbr.rel (%p559) target = $region67
              $region64: #{knn_forward.1} parent=59 // loop_body
                %v565 = vld [vmem:[%s563] sm:%s556]
                %566 = vst [vmem:[%s564] sm:%s556] %v565
                %v567 = vld [vmem:[%s563 + $0x8] sm:%s556]
                %568 = vst [vmem:[%s564 + $0x10] sm:%s556] %v567
              $region65: #{knn_forward.1} parent=59 // loop_footer
                %s562 = sadd.s32 1, %s558
              $region66: #{knn_forward.1} parent=59 // loop_footer_branch
                %557 = sbr.rel target = $region62
              $region67: #{knn_forward.1} parent=59 // loop_exit
                _
            $region60: #{knn_forward.1} parent=51 // pred_fallthru
              _
          $region52: #{knn_forward.1} parent=47 // pred_fallthru
            _
          %585 = vnop
        $region48: #{knn_forward.1} parent=31 // pred_fallthru
          _
      $region32: #{knn_forward.1} parent=5 // pred_fallthru
        _
      %p586 = scmp.le.s32.totalorder 2, %s12
      // Predicated region
      $region83: #{knn_forward.1} parent=5 // pred_check
        %p587 = pneg %p586
      $region84: #{knn_forward.1} parent=5 // pred_check_branch
        %589 = sbr.rel (%p587) target = $region86
      $region85: #{knn_forward.1} parent=5 // pred_region
        %s590 = ssub.s32 %s12, 2
        // Predicated region
        $region87: #{knn_forward.1} parent=85 // pred_check
          %p591 = pneg %p131
        $region88: #{knn_forward.1} parent=85 // pred_check_branch
          %593 = sbr.rel (%p591) target = $region90
        $region89: #{knn_forward.1} parent=85 // pred_region
          %s594 = sand.u32 %s116, 1
          %s595 = sand.u32 %s116, 1
          %s596 = smul.addr %s595, 16
          %s597 = scalar_lea.vmem [#allocation5], %s596
        $region90: #{knn_forward.1} parent=85 // pred_fallthru
          _
      $region86: #{knn_forward.1} parent=5 // pred_fallthru
        _
    $region6: #{knn_forward.1} parent=1 // loop_footer
      %s16 = sadd.s32 1, %s12
    $region7: #{knn_forward.1} parent=1 // loop_footer_branch
      %11 = sbr.rel target = $region3
    $region8: #{knn_forward.1} parent=1 // loop_exit
      _
    %598 = vsyncpa [#allocation4], 1
    %s599 = scalar_lea.sflag [#allocation4], 1
    %600 = vsyncpa %s599, 1

</llo_original>
